<compile_context>
chip_gen: v7x
topology: tpu7x:2x2x1
jax: 0.10.0
libtpu: 0.0.40
codegen_flags: <defaults>
</compile_context>

<pallas_src>
import functools
import math

import jax
import jax.numpy as jnp
from jax.experimental import pallas as pl
from jax.experimental.pallas import tpu as pltpu


# ----------------------------------------------------------------------------
# helpers
# ----------------------------------------------------------------------------
def _pick_tile(dim, prefs):
    """Largest preferred tile that divides `dim`, else the full dim."""
    for p in prefs:
        if dim % p == 0:
            return p
    return dim


# ----------------------------------------------------------------------------
# Kernel 1: tiled linear  y = x @ W + b      (W stored as [F_in, F_out])
# ----------------------------------------------------------------------------
def _linear_kernel(x_ref, w_ref, b_ref, o_ref, acc_ref):
    @pl.when(pl.program_id(2) == 0)
    def _():
        acc_ref[...] = jnp.zeros_like(acc_ref)

    acc_ref[...] += jnp.dot(x_ref[...], w_ref[...],
                            preferred_element_type=jnp.float32)

    @pl.when(pl.program_id(2) == pl.num_programs(2) - 1)
    def _():
        o_ref[...] = (acc_ref[...] + b_ref[...].astype(jnp.float32)
                      ).astype(o_ref.dtype)


def linear(x, w, b):
    """x: [M, F_in], w: [F_in, F_out], b: [F_out] -> [M, F_out]."""
    M, K = x.shape
    N = w.shape[1]

    tm = _pick_tile(M, (256, 128, 64, 32, 16, 8))
    tn = _pick_tile(N, (256, 128))          # lane dim: multiple of 128 or full
    tk = _pick_tile(K, (512, 256, 128))     # lane dim of x / sublane dim of w

    return pl.pallas_call(
        _linear_kernel,
        out_shape=jax.ShapeDtypeStruct((M, N), x.dtype),
        grid=(M // tm, N // tn, K // tk),
        in_specs=[
            pl.BlockSpec((tm, tk), lambda i, j, k: (i, k)),
            pl.BlockSpec((tk, tn), lambda i, j, k: (k, j)),
            pl.BlockSpec((1, tn), lambda i, j, k: (0, j)),
        ],
        out_specs=pl.BlockSpec((tm, tn), lambda i, j, k: (i, j)),
        scratch_shapes=[pltpu.VMEM((tm, tn), jnp.float32)],
        compiler_params=pltpu.CompilerParams(
            dimension_semantics=("parallel", "parallel", "arbitrary")),
    )(x, w, b.reshape(1, N))


# ----------------------------------------------------------------------------
# Kernel 2: per-(batch, q-tile) attention over ALL heads, mask + softmax.
#   q_ref : (tq, nhid)      k_ref/v_ref : (Lk, nhid)
#   mask  : (Mq, Lk) int8   (Mq == 1 broadcasts over query rows)
#   ctx   : (tq, nhid)      attn : (nheads, tq, Lk)
# ----------------------------------------------------------------------------
def _mha_attn_kernel(q_ref, k_ref, v_ref, mask_ref, ctx_ref, attn_ref, *,
                     nheads, head_dim, inv_scale):
    q = q_ref[...]
    k = k_ref[...]
    v = v_ref[...]
    invalid = mask_ref[...].astype(jnp.int32) == 0          # (Mq, Lk)
    neg = jnp.float32(-10000000000.0)

    ctx_parts = []
    for h in range(nheads):                                  # static unroll
        sl = slice(h * head_dim, (h + 1) * head_dim)
        qh = q[:, sl] * inv_scale                            # pre-scale q
        kh = k[:, sl]
        vh = v[:, sl]

        # energy = (q/scale) @ k^T, contracting D directly (no transpose)
        energy = jax.lax.dot_general(
            qh, kh, dimension_numbers=(((1,), (1,)), ((), ())),
            preferred_element_type=jnp.float32)              # (tq, Lk) f32

        energy = jnp.where(invalid, neg, energy)             # masked_fill

        e_max = jnp.max(energy, axis=-1, keepdims=True)
        p = jnp.exp(energy - e_max)
        denom = jnp.sum(p, axis=-1, keepdims=True)
        attn = p * pl.reciprocal(denom, approx=True)         # EUP reciprocal

        ctx = jnp.dot(attn.astype(vh.dtype), vh,
                      preferred_element_type=jnp.float32)    # (tq, D)

        attn_ref[h] = attn.astype(attn_ref.dtype)
        ctx_parts.append(ctx)

    # single lane-dense store of all heads: (tq, nhid)
    ctx_ref[...] = jnp.concatenate(ctx_parts, axis=-1).astype(ctx_ref.dtype)


def attention(Q, K, V, mask_canon, nheads, scale):
    """Q: [B,Lq,nhid], K/V: [B,Lk,nhid], mask_canon: [B, 1|Lq, Lk] int8."""
    B, Lq, nhid = Q.shape
    Lk = K.shape[1]
    D = nhid // nheads
    Mq = mask_canon.shape[1]

    tq = _pick_tile(Lq, (256, 128, 64, 32, 16, 8))
    n_q = Lq // tq

    mq_blk = 1 if Mq == 1 else tq
    if Mq == 1:
        mask_map = lambda b, qi: (b, 0, 0)
    else:
        mask_map = lambda b, qi: (b, qi, 0)

    kernel = functools.partial(_mha_attn_kernel, nheads=nheads, head_dim=D,
                               inv_scale=float(1.0 / scale))

    ctx, attn = pl.pallas_call(
        kernel,
        out_shape=(
            jax.ShapeDtypeStruct((B, Lq, nhid), Q.dtype),
            jax.ShapeDtypeStruct((B, nheads, Lq, Lk), jnp.float32),
        ),
        grid=(B, n_q),
        in_specs=[
            pl.BlockSpec((None, tq, nhid), lambda b, qi: (b, qi, 0)),
            pl.BlockSpec((None, Lk, nhid), lambda b, qi: (b, 0, 0)),
            pl.BlockSpec((None, Lk, nhid), lambda b, qi: (b, 0, 0)),
            pl.BlockSpec((None, mq_blk, Lk), mask_map),
        ],
        out_specs=(
            pl.BlockSpec((None, tq, nhid), lambda b, qi: (b, qi, 0)),
            pl.BlockSpec((None, nheads, tq, Lk), lambda b, qi: (b, 0, qi, 0)),
        ),
        compiler_params=pltpu.CompilerParams(
            dimension_semantics=("parallel", "parallel")),
    )(Q, K, V, mask_canon)
    return ctx, attn


# ----------------------------------------------------------------------------
# mask canonicalization: anything broadcastable to [B,1,Lq,Lk] -> [B, 1|Lq, Lk] int8
# ----------------------------------------------------------------------------
def _canonicalize_mask(mask, B, Lq, Lk):
    if mask is None:
        return jnp.ones((B, 1, Lk), jnp.int8)
    m = (jnp.asarray(mask) != 0)
    if m.ndim == 4:                       # [B|1, 1(heads), Lq|1, Lk]
        m = m[:, 0, :, :]
    elif m.ndim == 2:
        m = m[None] if m.shape == (Lq, Lk) else m[:, None, :]
    bm, mq, lkm = m.shape
    assert lkm == Lk and mq in (1, Lq)
    if bm != B:
        m = jnp.broadcast_to(m, (B, mq, Lk))
    return m.astype(jnp.int8)


# ----------------------------------------------------------------------------
# MultiHeadAttentionLayer forward (wrapper glue)
# ----------------------------------------------------------------------------
def init_params(key, nhid):
    ks = jax.random.split(key, 8)
    std = 0.02

    def w(k):  # stored as [F_in, F_out] (PyTorch weight transposed)
        return jax.random.normal(k, (nhid, nhid), jnp.float32) * std

    def b(k):
        return jax.random.normal(k, (nhid,), jnp.float32) * std

    return {
        "wq": w(ks[0]), "bq": b(ks[1]),
        "wk": w(ks[2]), "bk": b(ks[3]),
        "wv": w(ks[4]), "bv": b(ks[5]),
        "wo": w(ks[6]), "bo": b(ks[7]),
    }


def mha_forward(params, query, key, value, mask, nheads):
    B, Lq, nhid = query.shape
    Lk = key.shape[1]
    assert nhid % nheads == 0
    D = nhid // nheads
    scale = math.sqrt(float(D))

    q2 = query.reshape(B * Lq, nhid)

    # ---- projections: fuse GEMMs when the inputs alias (self-attention) ----
    if (query is key) and (key is value):
        w_qkv = jnp.concatenate([params["wq"], params["wk"], params["wv"]], axis=1)
        b_qkv = jnp.concatenate([params["bq"], params["bk"], params["bv"]])
        qkv = linear(q2, w_qkv, b_qkv)                        # [B*L, 3*nhid]
        Q, K, V = qkv[:, :nhid], qkv[:, nhid:2 * nhid], qkv[:, 2 * nhid:]
    elif key is value:
        k2 = key.reshape(B * Lk, nhid)
        w_kv = jnp.concatenate([params["wk"], params["wv"]], axis=1)
        b_kv = jnp.concatenate([params["bk"], params["bv"]])
        Q = linear(q2, params["wq"], params["bq"])
        kv = linear(k2, w_kv, b_kv)
        K, V = kv[:, :nhid], kv[:, nhid:]
    else:
        Q = linear(q2, params["wq"], params["bq"])
        K = linear(key.reshape(B * Lk, nhid), params["wk"], params["bk"])
        V = linear(value.reshape(B * Lk, nhid), params["wv"], params["bv"])

    Q = Q.reshape(B, Lq, nhid)
    K = K.reshape(B, Lk, nhid)
    V = V.reshape(B, Lk, nhid)

    mask_canon = _canonicalize_mask(mask, B, Lq, Lk)

    # attention: heads split / merged purely inside the kernel (no transposes)
    ctx, attn = attention(Q, K, V, mask_canon, nheads, scale)

    # output projection.  TODO(synk): could be fused into the attention epilogue.
    out = linear(ctx.reshape(B * Lq, nhid), params["wo"], params["bo"])
    return out.reshape(B, Lq, nhid), attn


# ----------------------------------------------------------------------------
# Pure-JAX reference for correctness
# ----------------------------------------------------------------------------
def mha_reference(params, query, key, value, mask, nheads):
    B, Lq, nhid = query.shape
    Lk = key.shape[1]
    D = nhid // nheads
    scale = jnp.sqrt(jnp.float32(D))

    Q = query @ params["wq"] + params["bq"]
    K = key @ params["wk"] + params["bk"]
    V = value @ params["wv"] + params["bv"]
    Q = Q.reshape(B, Lq, nheads, D).transpose(0, 2, 1, 3)
    K = K.reshape(B, Lk, nheads, D).transpose(0, 2, 1, 3)
    V = V.reshape(B, Lk, nheads, D).transpose(0, 2, 1, 3)
    energy = jnp.einsum("bhqd,bhkd->bhqk", Q, K) / scale
    if mask is not None:
        energy = jnp.where(mask == 0, -10000000000.0, energy)
    attn = jax.nn.softmax(energy, axis=-1)
    x = jnp.einsum("bhqk,bhkd->bhqd", attn, V)
    x = x.transpose(0, 2, 1, 3).reshape(B, Lq, nhid)
    x = x @ params["wo"] + params["bo"]
    return x, attn


if __name__ == "__main__":
    B, L, nhid, nheads = 2, 8, 32, 4

    root = jax.random.PRNGKey(0)
    kp, kx, kq, kk, kv = jax.random.split(root, 5)
    params = init_params(kp, nhid)

    # --- case 1: self-attention with a padding mask (fused-QKV path) -------
    x = jax.random.normal(kx, (B, L, nhid), jnp.float32)
    mask = jnp.ones((B, 1, 1, L), jnp.int32)
    mask = mask.at[1, :, :, -2:].set(0)     # mask last two keys of batch 1

    out, attn = mha_forward(params, x, x, x, mask, nheads)
    out = jax.block_until_ready(out)
    attn = jax.block_until_ready(attn)

    ref_out, ref_attn = mha_reference(params, x, x, x, mask, nheads)
    assert out.shape == (B, L, nhid)
    assert attn.shape == (B, nheads, L, L)
    assert jnp.allclose(out, ref_out, atol=2e-3, rtol=2e-3)
    assert jnp.allclose(attn, ref_attn, atol=2e-3, rtol=2e-3)

    # --- case 2: cross-attention, distinct q/k/v, no mask ------------------
    Lk = 16
    q2 = jax.random.normal(kq, (B, L, nhid), jnp.float32)
    k2 = jax.random.normal(kk, (B, Lk, nhid), jnp.float32)
    v2 = jax.random.normal(kv, (B, Lk, nhid), jnp.float32)

    out2, attn2 = mha_forward(params, q2, k2, v2, None, nheads)
    out2 = jax.block_until_ready(out2)
    attn2 = jax.block_until_ready(attn2)

    ref_out2, ref_attn2 = mha_reference(params, q2, k2, v2, None, nheads)
    assert out2.shape == (B, L, nhid)
    assert attn2.shape == (B, nheads, L, Lk)
    assert jnp.allclose(out2, ref_out2, atol=2e-3, rtol=2e-3)
    assert jnp.allclose(attn2, ref_attn2, atol=2e-3, rtol=2e-3)

    print("KERNEL_OK")
</pallas_src>

<mosaic_0001>
module attributes {stable_mosaic.version = 11 : i64} {
  func.func @_linear_kernel(%arg0: i32, %arg1: i32, %arg2: i32, %arg3: memref<16x32xf32, #tpu.memory_space<vmem>>, %arg4: memref<32x96xf32, #tpu.memory_space<vmem>>, %arg5: memref<1x96xf32, #tpu.memory_space<vmem>>, %arg6: memref<16x96xf32, #tpu.memory_space<vmem>>, %arg7: memref<16x96xf32, #tpu.memory_space<vmem>>) attributes {dimension_semantics = [#tpu.dimension_semantics<parallel>, #tpu.dimension_semantics<parallel>, #tpu.dimension_semantics<arbitrary>], iteration_bounds = array<i64: 1, 1, 1>, scalar_prefetch = 0 : i64, scratch_operands = 1 : i64, tpu.core_type = #tpu.core_type<tc>, window_params = [{transform_indices = @transform_0, window_bounds = array<i64: 16, 32>}, {transform_indices = @transform_1, window_bounds = array<i64: 32, 96>}, {transform_indices = @transform_2, window_bounds = array<i64: 1, 96>}, {transform_indices = @transform_3, window_bounds = array<i64: 16, 96>}]} {
    %c0_i32 = arith.constant 0 : i32
    %0 = arith.cmpi eq, %arg2, %c0_i32 : i32
    %1 = arith.extui %0 : i1 to i32
    %c0_i32_0 = arith.constant 0 : i32
    %2 = arith.cmpi ne, %1, %c0_i32_0 : i32
    scf.if %2 {
      %cst_10 = arith.constant 0.000000e+00 : f32
      %12 = vector.broadcast %cst_10 : f32 to vector<16x96xf32>
      %c0_11 = arith.constant 0 : index
      %c0_12 = arith.constant 0 : index
      %13 = vector.load %arg7[%c0_11, %c0_12] : memref<16x96xf32, #tpu.memory_space<vmem>>, vector<16x96xf32>
      tpu.vector_store %arg7[%c0_11, %c0_12], %12 {strides = array<i32>} : memref<16x96xf32, #tpu.memory_space<vmem>>, vector<16x96xf32>,
    } else {
    }
    %c0 = arith.constant 0 : index
    %c0_1 = arith.constant 0 : index
    %3 = vector.load %arg7[%c0, %c0_1] : memref<16x96xf32, #tpu.memory_space<vmem>>, vector<16x96xf32>
    %c0_2 = arith.constant 0 : index
    %c0_3 = arith.constant 0 : index
    %4 = vector.load %arg3[%c0_2, %c0_3] : memref<16x32xf32, #tpu.memory_space<vmem>>, vector<16x32xf32>
    %c0_4 = arith.constant 0 : index
    %c0_5 = arith.constant 0 : index
    %5 = vector.load %arg4[%c0_4, %c0_5] : memref<32x96xf32, #tpu.memory_space<vmem>>, vector<32x96xf32>
    %cst = arith.constant dense<0.000000e+00> : vector<16x96xf32>
    %6 = tpu.matmul %4, %5, %cst {dimension_numbers = #tpu.dot_dimension_numbers<[1], [0], [0], [1], [0, 0, 1, 1], [], []>} : vector<16x32xf32>, vector<32x96xf32>, vector<16x96xf32> -> vector<16x96xf32>
    %7 = arith.addf %3, %6 : vector<16x96xf32>
    %c0_6 = arith.constant 0 : index
    %c0_7 = arith.constant 0 : index
    %8 = vector.load %arg7[%c0_6, %c0_7] : memref<16x96xf32, #tpu.memory_space<vmem>>, vector<16x96xf32>
    tpu.vector_store %arg7[%c0_6, %c0_7], %7 {strides = array<i32>} : memref<16x96xf32, #tpu.memory_space<vmem>>, vector<16x96xf32>,
    %c0_i32_8 = arith.constant 0 : i32
    %9 = arith.cmpi eq, %arg2, %c0_i32_8 : i32
    %10 = arith.extui %9 : i1 to i32
    %c0_i32_9 = arith.constant 0 : i32
    %11 = arith.cmpi ne, %10, %c0_i32_9 : i32
    scf.if %11 {
      %c0_10 = arith.constant 0 : index
      %c0_11 = arith.constant 0 : index
      %12 = vector.load %arg7[%c0_10, %c0_11] : memref<16x96xf32, #tpu.memory_space<vmem>>, vector<16x96xf32>
      %c0_12 = arith.constant 0 : index
      %c0_13 = arith.constant 0 : index
      %13 = vector.load %arg5[%c0_12, %c0_13] : memref<1x96xf32, #tpu.memory_space<vmem>>, vector<1x96xf32>
      %14 = vector.broadcast %13 : vector<1x96xf32> to vector<16x96xf32>
      %15 = arith.addf %12, %14 : vector<16x96xf32>
      %c0_14 = arith.constant 0 : index
      %c0_15 = arith.constant 0 : index
      %16 = vector.load %arg6[%c0_14, %c0_15] : memref<16x96xf32, #tpu.memory_space<vmem>>, vector<16x96xf32>
      tpu.vector_store %arg6[%c0_14, %c0_15], %15 {strides = array<i32>} : memref<16x96xf32, #tpu.memory_space<vmem>>, vector<16x96xf32>,
    } else {
    }
    return
  }
  func.func @transform_0(%arg0: i32, %arg1: i32, %arg2: i32) -> (i32, i32) {
    %c0_i32 = arith.constant 0 : i32
    return %arg0, %arg2 : i32, i32
  }
  func.func @transform_1(%arg0: i32, %arg1: i32, %arg2: i32) -> (i32, i32) {
    %c0_i32 = arith.constant 0 : i32
    return %arg2, %arg1 : i32, i32
  }
  func.func @transform_2(%arg0: i32, %arg1: i32, %arg2: i32) -> (i32, i32) {
    %c0_i32 = arith.constant 0 : i32
    %c0_i32_0 = arith.constant 0 : i32
    return %c0_i32, %arg1 : i32, i32
  }
  func.func @transform_3(%arg0: i32, %arg1: i32, %arg2: i32) -> (i32, i32) {
    %c0_i32 = arith.constant 0 : i32
    return %arg0, %arg1 : i32, i32
  }
}

</mosaic_0001>

<llo_original>
// kernel: tpu_custom_call.1
$region0: #{tpu_custom_call.1}
  #allocation0 [shape = 'u32[]', space=smem, size = 0x4, offset = 0x4, fixed_abs, tag = 'smem constant byte address 0x4 - core index']
  #allocation1 [shape = 'u32[144,128]{1,0:T(1,128)}', space=vmem, size = 0x12000, scoped, tag = 'internal scratch']
  #allocation2 [shape = 'f32[16,96]{1,0:T(8,128)}', space=vmem, size = 0x2000, scoped, tag = 'scratch operand']
  %s0 = inlined_call_operand.hbm [shape: f32[16,32], index: 0, kind: input, shape index: {}]
  %s1 = inlined_call_operand.hbm [shape: f32[32,96], index: 1, kind: input, shape index: {}]
  %s2 = inlined_call_operand.vmem [shape: f32[1,96], index: 2, kind: input, shape index: {}]
  %s3 = inlined_call_operand.hbm [shape: f32[16,96], index: 3, kind: output, shape index: {}]
  %s4 = sld [smem:[#allocation0]]
  $region38: #{tpu_custom_call.1} parent=0
    _
  %s6 = ssub.s32 1, %s4
  %s7 = scalar_select 0, %s6, %s4
  $region1: #{tpu_custom_call.1} parent=0
    #allocation3 [shape = 'u8[8192]{0}', space=vmem, size = 0x2000, scoped, tag = 'input window, operand 0, single buffered']
    #allocation4 [shape = 's32[1]{0}', space=sflag, size = 0x4, scoped, tag = 'scoped memory for tpu_custom_call.1']
    #allocation5 [shape = 's32[1]{0}', space=sflag, size = 0x4, scoped, tag = 'scoped memory for tpu_custom_call.1']
    #allocation6 [shape = 'u8[16384]{0}', space=vmem, size = 0x4000, scoped, tag = 'input window, operand 1, single buffered']
    #allocation7 [shape = 's32[1]{0}', space=sflag, size = 0x4, scoped, tag = 'scoped memory for tpu_custom_call.1']
    #allocation8 [shape = 'u8[8192]{0}', space=vmem, size = 0x2000, scoped, tag = 'output window, operand 0, single buffered']
    %8 = vsyncpa [#allocation4], 0
    %9 = vsyncpa [#allocation7], 0
    %10 = vsyncpa [#allocation5], 0
    // Predicated region
    $region2: #{tpu_custom_call.1} parent=1 // pred_check
      _
    $region3: #{tpu_custom_call.1} parent=1 // pred_check_branch
      %12 = sbr.rel (0) target = $region5
    $region4: #{tpu_custom_call.1} parent=1 // pred_region
      %s14 = ssub.s32 256, 256
      %15 = vsyncadd [#allocation4], %s14
      %s16 = sshll.u32 [#allocation3], 4
      %s17 = int_to_ptr.vmem [resolvable:$true] %s16
      %22 = dma.hbm_to_vmem [thread:$0]  %s0, 256, %s17, [#allocation4], 128, 128, 8
    $region5: #{tpu_custom_call.1} parent=1 // pred_fallthru
      _
    // Predicated region
    $region6: #{tpu_custom_call.1} parent=1 // pred_check
      _
    $region7: #{tpu_custom_call.1} parent=1 // pred_check_branch
      %24 = sbr.rel (0) target = $region9
    $region8: #{tpu_custom_call.1} parent=1 // pred_region
      %s26 = ssub.s32 512, 512
      %27 = vsyncadd [#allocation7], %s26
      %s28 = sshll.u32 [#allocation6], 4
      %s29 = int_to_ptr.vmem [resolvable:$true] %s28
      %34 = dma.hbm_to_vmem [thread:$0]  %s1, 512, %s29, [#allocation7], 128, 128, 8
    $region9: #{tpu_custom_call.1} parent=1 // pred_fallthru
      _
    // Predicated region
    $region10: #{tpu_custom_call.1} parent=1 // pred_check
      _
    $region11: #{tpu_custom_call.1} parent=1 // pred_check_branch
      %36 = sbr.rel (0) target = $region13
    $region12: #{tpu_custom_call.1} parent=1 // pred_region
      _
    $region13: #{tpu_custom_call.1} parent=1 // pred_fallthru
      _
    // Predicated region
    $region14: #{tpu_custom_call.1} parent=1 // pred_check
      _
    $region15: #{tpu_custom_call.1} parent=1 // pred_check_branch
      %38 = sbr.rel (0) target = $region17
    $region16: #{tpu_custom_call.1} parent=1 // pred_region
      %39 = dma.done [#allocation4], 256
    $region17: #{tpu_custom_call.1} parent=1 // pred_fallthru
      _
    // Predicated region
    $region18: #{tpu_custom_call.1} parent=1 // pred_check
      _
    $region19: #{tpu_custom_call.1} parent=1 // pred_check_branch
      %41 = sbr.rel (0) target = $region21
    $region20: #{tpu_custom_call.1} parent=1 // pred_region
      %42 = dma.done [#allocation7], 512
    $region21: #{tpu_custom_call.1} parent=1 // pred_fallthru
      _
    %p43 = scmp.eq.s32.totalorder 0, 0
    // Predicated region
    $region22: #{tpu_custom_call.1} parent=1 // pred_check
      %p44 = pneg %p43
    $region23: #{tpu_custom_call.1} parent=1 // pred_check_branch
      %46 = sbr.rel (%p44) target = $region25
    $region24: #{tpu_custom_call.1} parent=1 // pred_region
      %vm47 = vcmask 785408
      %48 = vst.msk [vmem:[#allocation2] sm:$0xff] %vm47, 0.0
      %49 = vst.msk [vmem:[#allocation2 + $0x8] sm:$0xff] %vm47, 0.0
    $region25: #{tpu_custom_call.1} parent=1 // pred_fallthru
      _
    %v50 = vld [vmem:[#allocation2] sm:$0xff]
    %v51 = vld [vmem:[#allocation2 + $0x8] sm:$0xff]
    %v52 = vld [vmem:[#allocation3] sm:$0xff]
    %v53 = vld [vmem:[#allocation3 + $0x8] sm:$0xff]
    %v54 = vld [vmem:[#allocation6] sm:$0xff]
    %v55 = vld [vmem:[#allocation6 + $0x8] sm:$0xff]
    %v56 = vld [vmem:[#allocation6 + $0x10] sm:$0xff]
    %v57 = vld [vmem:[#allocation6 + $0x18] sm:$0xff]
    %vm58 = vcmask 261120
    %v60 = vsel %vm58, %v52, 0
    %v63 = vsel %vm58, %v53, 0
    %65 = vmatprep.subr.mxu0 0.0
    %66 = vmatpush1.msra.mxu0 %v54
    %67 = vmatprep.subr.mxu0 0.0
    %68 = vmatpush1.msra.mxu0 %v55
    %69 = vmatprep.subr.mxu0 0.0
    %70 = vmatpush1.msra.mxu0 %v56
    %71 = vmatprep.subr.mxu0 0.0
    %72 = vmatpush1.msra.mxu0 %v57
    %73 = vmatprep.subr.mxu0 0.0
    %74 = vmatpush1.msra.mxu0 0.0
    %75 = vmatprep.subr.mxu0 0.0
    %76 = vmatpush1.msra.mxu0 0.0
    %77 = vmatprep.subr.mxu0 0.0
    %78 = vmatpush1.msra.mxu0 0.0
    %79 = vmatprep.subr.mxu0 0.0
    %80 = vmatpush1.msra.mxu0 0.0
    %81 = vmatprep.subr.mxu0 0.0
    %82 = vmatpush1.msra.mxu0 0.0
    %83 = vmatprep.subr.mxu0 0.0
    %84 = vmatpush1.msra.mxu0 0.0
    %85 = vmatprep.subr.mxu0 0.0
    %86 = vmatpush1.msra.mxu0 0.0
    %87 = vmatprep.subr.mxu0 0.0
    %88 = vmatpush1.msra.mxu0 0.0
    %89 = vmatprep.subr.mxu0 0.0
    %90 = vmatpush1.msra.mxu0 0.0
    %91 = vmatprep.subr.mxu0 0.0
    %92 = vmatpush1.msra.mxu0 0.0
    %93 = vmatprep.subr.mxu0 0.0
    %94 = vmatpush1.msra.mxu0 0.0
    %95 = vmatprep.subr.mxu0 0.0
    %96 = vmatpush1.msra.mxu0 0.0
    %97 = vmatprep.subr.mxu0 0.0
    %98 = vmatpush1.msra.mxu0 0.0
    %99 = vmatprep.subr.mxu0 0.0
    %100 = vmatpush1.msra.mxu0 0.0
    %101 = vmatprep.subr.mxu0 0.0
    %102 = vmatpush1.msra.mxu0 0.0
    %103 = vmatprep.subr.mxu0 0.0
    %104 = vmatpush1.msra.mxu0 0.0
    %105 = vmatprep.subr.mxu0 0.0
    %106 = vmatpush1.msra.mxu0 0.0
    %107 = vmatprep.subr.mxu0 0.0
    %108 = vmatpush1.msra.mxu0 0.0
    %109 = vmatprep.subr.mxu0 0.0
    %110 = vmatpush1.msra.mxu0 0.0
    %111 = vmatprep.subr.mxu0 0.0
    %112 = vmatpush1.msra.mxu0 0.0
    %113 = vmatprep.subr.mxu0 0.0
    %114 = vmatpush1.msra.mxu0 0.0
    %115 = vmatprep.subr.mxu0 0.0
    %116 = vmatpush1.msra.mxu0 0.0
    %117 = vmatprep.subr.mxu0 0.0
    %118 = vmatpush1.msra.mxu0 0.0
    %119 = vmatprep.subr.mxu0 0.0
    %120 = vmatpush1.msra.mxu0 0.0
    %121 = vmatprep.subr.mxu0 0.0
    %122 = vmatpush1.msra.mxu0 0.0
    %123 = vmatprep.subr.mxu0 0.0
    %124 = vmatpush1.msra.mxu0 0.0
    %125 = vmatprep.subr.mxu0 0.0
    %126 = vmatpush1.msra.mxu0 0.0
    %127 = vmatprep.subr.mxu0 0.0
    %128 = vmatpush1.msra.mxu0 0.0
    %129 = vmatprep.mubr.f32.mxu0 0.0
    %130 = vmatmul.mubr.f32.gmra.mrb[0].mxu0 %v60
    %v131 = vpop.f32.mrb[0].mxu0
    %v132 = vadd.f32 0.0, %v131
    %v133 = vpop.f32.mrb[0].mxu0
    %134 = vmatprep.mubr.f32.mxu0 0.0
    %135 = vmatmul.mubr.f32.gmra.mrb[0].mxu0 %v63
    %v136 = vpop.f32.mrb[0].mxu0
    %v137 = vadd.f32 0.0, %v136
    %v138 = vpop.f32.mrb[0].mxu0
    %139 = vdwg.mxu0
    %v140 = vadd.f32 %v50, %v132
    %v141 = vadd.f32 %v51, %v137
    %vm142 = vcmask 785408
    %143 = vst.msk [vmem:[#allocation2] sm:$0xff] %vm142, %v140
    %144 = vst.msk [vmem:[#allocation2 + $0x8] sm:$0xff] %vm142, %v141
    // Predicated region
    $region26: #{tpu_custom_call.1} parent=1 // pred_check
      %p145 = pneg %p43
    $region27: #{tpu_custom_call.1} parent=1 // pred_check_branch
      %147 = sbr.rel (%p145) target = $region29
    $region28: #{tpu_custom_call.1} parent=1 // pred_region
      %v148 = vld [vmem:[#allocation2] sm:$0xff]
      %v149 = vld [vmem:[#allocation2 + $0x8] sm:$0xff]
      %v150 = vld [vmem:[%s2] sm:$0x1]
      %v152 = vlaneseq
      %v153 = vshrl.u32 %v152, 7
      %v154 = vsub.s32 0, %v153
      %v155 = vrot.slane %v150, %v154
      %v157 = vadd.f32 %v148, %v155
      %v158 = vadd.f32 %v149, %v155
      %159 = vst.msk [vmem:[#allocation8] sm:$0xff] %vm142, %v157
      %160 = vst.msk [vmem:[#allocation8 + $0x8] sm:$0xff] %vm142, %v158
    $region29: #{tpu_custom_call.1} parent=1 // pred_fallthru
      _
    // Predicated region
    $region30: #{tpu_custom_call.1} parent=1 // pred_check
      _
    $region31: #{tpu_custom_call.1} parent=1 // pred_check_branch
      %162 = sbr.rel (0) target = $region33
    $region32: #{tpu_custom_call.1} parent=1 // pred_region
      %s164 = ssub.s32 256, 256
      %165 = vsyncadd [#allocation5], %s164
      %s166 = sshll.u32 [#allocation8], 4
      %s167 = int_to_ptr.vmem [resolvable:$true] %s166
      %172 = dma.vmem_to_hbm [thread:$0]  %s167, 256, %s3, [#allocation5], 128, 128, 8
    $region33: #{tpu_custom_call.1} parent=1 // pred_fallthru
      _
    // Predicated region
    $region34: #{tpu_custom_call.1} parent=1 // pred_check
      _
    $region35: #{tpu_custom_call.1} parent=1 // pred_check_branch
      %174 = sbr.rel (0) target = $region37
    $region36: #{tpu_custom_call.1} parent=1 // pred_region
      %175 = dma.done [#allocation5], 256
    $region37: #{tpu_custom_call.1} parent=1 // pred_fallthru
      _
    %176 = vsyncpa [#allocation4], 1
    %177 = vsyncpa [#allocation7], 1
    %178 = vsyncpa [#allocation5], 1

</llo_original>
